<compile_context>
chip_gen: v7x
topology: tpu7x:2x2x1
jax: 0.10.0
libtpu: 0.0.40
codegen_flags: <defaults>
</compile_context>

<pallas_src>
from typing import Any, NamedTuple

import jax
import jax.numpy as jnp
from jax.experimental import pallas as pl
from jax.experimental.pallas import tpu as pltpu


# ----------------------------------------------------------------------------------
# Kernels
# ----------------------------------------------------------------------------------
def _linear_tiled_kernel(x_ref, w_ref, b_ref, o_ref, acc_ref):
    """Grid = (M tiles, N tiles, K tiles); K (reduction) is last and 'arbitrary'."""
    k = pl.program_id(2)

    @pl.when(k == 0)
    def _init():
        # Seed the f32 accumulator with the (already VMEM-resident) bias tile so the
        # epilogue is a pure downcast/store.
        acc_ref[...] = jnp.broadcast_to(b_ref[...], acc_ref.shape)

    # x_ref: [tm, tk], w_ref: [tk, tn] (weight pre-transposed at prep time -> pure MXU).
    acc_ref[...] += jnp.dot(x_ref[...], w_ref[...],
                            preferred_element_type=jnp.float32)

    @pl.when(k == pl.num_programs(2) - 1)
    def _finalize():
        o_ref[...] = acc_ref[...].astype(o_ref.dtype)


def _linear_single_block_kernel(x_ref, w_ref, b_ref, o_ref):
    """Whole problem fits one tile: no grid, no scratch accumulator."""
    acc = jnp.dot(x_ref[...], w_ref[...], preferred_element_type=jnp.float32)
    o_ref[...] = (acc + b_ref[...]).astype(o_ref.dtype)


# ----------------------------------------------------------------------------------
# Tiling / parameter preparation (one-time, off the per-call hot path)
# ----------------------------------------------------------------------------------
def _round_up(x, m):
    return ((x + m - 1) // m) * m


def _cdiv(a, b):
    return -(-a // b)


def _vmem_capacity_bytes():
    try:
        info = pltpu.get_tpu_info()
        cap = getattr(info, "vmem_capacity_bytes", None)
        if cap:
            return int(cap)
    except Exception:
        pass
    return 64 * 1024 * 1024  # conservative (v7x per-core size); safe on every gen


def _split(total, cap, align):
    """Split `total` into the fewest tiles of (aligned) size <= cap."""
    total = max(int(total), 1)
    n = _cdiv(total, max(int(cap), align))
    tile = _round_up(_cdiv(total, n), align)
    return n, tile, n * tile


class LinearParams(NamedTuple):
    wt: jax.Array           # [Kp, Np] pre-transposed, padded, compute-dtype weight
    b2: jax.Array           # [1, Np]  padded f32 bias
    in_features: int
    out_features: int
    compute_dtype: Any
    sub: int                # sublane alignment for the batch (M) tile
    tm_cap: int
    tn: int
    tk: int
    Np: int
    Kp: int
    gn: int
    gk: int
    vmem_limit_bytes: int


def prepare_linear_params(weight, bias, *, compute_dtype=jnp.float32,
                          batch_hint=128, tile_caps=None):
    """One-time prep of nn.Linear params: weight [out, in] (PyTorch layout), bias [out]."""
    out_features, in_features = weight.shape
    cbytes = jnp.dtype(compute_dtype).itemsize
    sub = 16 if cbytes == 2 else 8

    vmem = _vmem_capacity_bytes()
    budget = int(0.60 * vmem)  # double-buffered tile budget (v7x ~38 MiB, v5e/v6e ~77 MiB)

    kp_full = _round_up(in_features, 128)
    np_full = _round_up(out_features, 128)
    mp_hint = max(sub, _round_up(batch_hint, sub))

    def fp(tm_c, tn_c, tk_c):
        # 2x double-buffered x / w / out tiles + f32 accumulator scratch (worst case).
        return (2 * (tm_c * tk_c * cbytes + tk_c * tn_c * cbytes + tm_c * tn_c * 4)
                + tm_c * tn_c * 4)

    if tile_caps is not None:
        # Manual override (testing / tuning): align, no auto sizing.
        tm_cap = max(sub, _round_up(int(tile_caps[0]), sub))
        tn_cap = max(128, _round_up(int(tile_caps[1]), 128))
        tk_cap = max(128, _round_up(int(tile_caps[2]), 128))
    else:
        tm_cap = min(512, mp_hint)
        tn_cap = min(512, np_full)
        tk_cap = min(2048, kp_full)

        # Shrink only if the budget is unusually small (defaults already fit 64 MiB VMEM).
        while fp(tm_cap, tn_cap, tk_cap) > budget:
            if tk_cap > 512:
                tk_cap = _round_up(tk_cap // 2, 128)
            elif tn_cap > 128:
                tn_cap = _round_up(tn_cap // 2, 128)
            elif tm_cap > sub:
                tm_cap = max(sub, _round_up(tm_cap // 2, sub))
            else:
                break

        # Grow while the VMEM budget allows: K first (fewer ~0.35 us grid steps), then M
        # (halves weight re-streaming for big batches), then N. 128 MiB parts (v5e/v6e)
        # naturally end up with bigger tiles than 64 MiB v7x.
        def try_grow(cap, full, footprint_of):
            while cap < full:
                new = min(full, cap * 2)
                if footprint_of(new) > budget:
                    break
                cap = new
            return cap

        tk_cap = try_grow(tk_cap, kp_full, lambda c: fp(tm_cap, tn_cap, c))
        tm_cap = try_grow(tm_cap, min(mp_hint, 2048), lambda c: fp(c, tn_cap, tk_cap))
        tn_cap = try_grow(tn_cap, np_full, lambda c: fp(tm_cap, c, tk_cap))

    gn, tn, Np = _split(out_features, tn_cap, 128)
    gk, tk, Kp = _split(in_features, tk_cap, 128)
    gm_hint, _, _ = _split(batch_hint, tm_cap, sub)

    # v7x megacore: if both parallel grid axes would collapse to one tile, split N so the
    # two TensorCores both get work (near-free on single-TC v5e/v6e).
    if tile_caps is None and gm_hint * gn == 1 and Np >= 256:
        gn, tn, Np = _split(out_features, max(128, _round_up(Np // 2, 128)), 128)

    # One-time: transpose to [in, out], pad to tile multiples, cast for the MXU.
    wt = weight.T
    if (Kp, Np) != (in_features, out_features):
        wt = jnp.pad(wt, ((0, Kp - in_features), (0, Np - out_features)))
    wt = wt.astype(compute_dtype)
    b2 = bias.astype(jnp.float32)
    if Np != out_features:
        b2 = jnp.pad(b2, (0, Np - out_features))
    b2 = b2.reshape(1, Np)

    vmem_limit = int(min(0.9 * vmem, max(32 * 1024 * 1024, 1.5 * fp(tm_cap, tn, tk))))

    return LinearParams(wt=wt, b2=b2, in_features=in_features,
                        out_features=out_features, compute_dtype=compute_dtype,
                        sub=sub, tm_cap=tm_cap, tn=tn, tk=tk, Np=Np, Kp=Kp,
                        gn=gn, gk=gk, vmem_limit_bytes=vmem_limit)


# ----------------------------------------------------------------------------------
# Forward
# ----------------------------------------------------------------------------------
def linear_forward(x, params: LinearParams):
    """Forward of nn.Linear: x [B, in] -> [B, out]."""
    B, K = x.shape
    if K != params.in_features:
        raise ValueError(f"expected in_features={params.in_features}, got {K}")

    tn, tk, Np, Kp, gn, gk = (params.tn, params.tk, params.Np, params.Kp,
                              params.gn, params.gk)
    gm, tm, Mp = _split(B, params.tm_cap, params.sub)

    out_dtype = x.dtype
    xp = x if x.dtype == params.compute_dtype else x.astype(params.compute_dtype)
    if (Mp, Kp) != (B, K):
        xp = jnp.pad(xp, ((0, Mp - B), (0, Kp - K)))

    if gm * gn * gk == 1:
        # Tiny / single-tile path: whole (padded) problem in VMEM, direct store.
        out_padded = pl.pallas_call(
            _linear_single_block_kernel,
            out_shape=jax.ShapeDtypeStruct((Mp, Np), out_dtype),
            compiler_params=pltpu.CompilerParams(
                vmem_limit_bytes=params.vmem_limit_bytes),
        )(xp, params.wt, params.b2)
    else:
        out_padded = pl.pallas_call(
            _linear_tiled_kernel,
            out_shape=jax.ShapeDtypeStruct((Mp, Np), out_dtype),
            grid_spec=pltpu.PrefetchScalarGridSpec(
                num_scalar_prefetch=0,
                grid=(gm, gn, gk),
                in_specs=[
                    pl.BlockSpec((tm, tk), lambda i, j, k: (i, k)),   # x tile
                    # Weight tile [in, out]; on v5e consider pipeline_mode=pl.Buffered(3)
                    # here if the profile shows exposed DMA.
                    pl.BlockSpec((tk, tn), lambda i, j, k: (k, j)),
                    pl.BlockSpec((1, tn), lambda i, j, k: (0, j)),    # bias tile
                ],
                out_specs=pl.BlockSpec((tm, tn), lambda i, j, k: (i, j)),
                scratch_shapes=[pltpu.VMEM((tm, tn), jnp.float32)],
            ),
            compiler_params=pltpu.CompilerParams(
                dimension_semantics=("parallel", "parallel", "arbitrary"),
                vmem_limit_bytes=params.vmem_limit_bytes),
        )(xp, params.wt, params.b2)

    if (Mp, Np) != (B, params.out_features):
        out_padded = out_padded[:B, :params.out_features]
    return out_padded


# ----------------------------------------------------------------------------------
# Demo / self-test
# ----------------------------------------------------------------------------------
if __name__ == "__main__":
    def make_inputs(key, batch, in_f, out_f):
        k_x, k_w, k_b = jax.random.split(key, 3)
        bound = 1.0 / (in_f ** 0.5)   # PyTorch nn.Linear default init: U(-1/sqrt(in), 1/sqrt(in))
        w = jax.random.uniform(k_w, (out_f, in_f), jnp.float32, minval=-bound, maxval=bound)
        b = jax.random.uniform(k_b, (out_f,), jnp.float32, minval=-bound, maxval=bound)
        x = jax.random.normal(k_x, (batch, in_f), jnp.float32)
        return x, w, b

    def ref_fn(x, w, b):
        return jnp.dot(x, w.T, precision="highest") + b

    k1, k2, k3 = jax.random.split(jax.random.PRNGKey(0), 3)

    # 1) Module config: LinearRegression(inputSize=32, outputSize=16), batch=8.
    #    Grid collapses to one tile -> single-block kernel path.
    x, w, b = make_inputs(k1, 8, 32, 16)
    params = prepare_linear_params(w, b, batch_hint=8)
    out = linear_forward(x, params)
    jax.block_until_ready(out)
    assert out.shape == (8, 16)
    assert jnp.allclose(out, ref_fn(x, w, b), atol=1e-5, rtol=1e-5)

    # 2) Auto-tiled path (f32): small batch triggers the N-split so >=2 parallel tiles.
    x2, w2, b2 = make_inputs(k2, 200, 1024, 512)
    p2 = prepare_linear_params(w2, b2, batch_hint=200)
    out2 = linear_forward(x2, p2)
    jax.block_until_ready(out2)
    assert jnp.allclose(out2, ref_fn(x2, w2, b2), atol=2e-3, rtol=2e-3)

    # 3) Forced small tiles to exercise the full (M,N,K) grid, the bias-seeded f32
    #    accumulator and padding in every dimension; f32 and bf16-compute variants.
    x3, w3, b3 = make_inputs(k3, 70, 1280, 320)
    p3 = prepare_linear_params(w3, b3, batch_hint=70, tile_caps=(64, 256, 512))
    out3 = linear_forward(x3, p3)
    jax.block_until_ready(out3)
    assert jnp.allclose(out3, ref_fn(x3, w3, b3), atol=2e-3, rtol=2e-3)

    p3b = prepare_linear_params(w3, b3, batch_hint=70, tile_caps=(64, 256, 512),
                                compute_dtype=jnp.bfloat16)
    out3b = linear_forward(x3, p3b)
    jax.block_until_ready(out3b)
    assert jnp.allclose(out3b, ref_fn(x3, w3, b3), atol=3e-2, rtol=3e-2)

    print("KERNEL_OK")
</pallas_src>

<mosaic_0001>
module attributes {stable_mosaic.version = 11 : i64} {
  func.func @_linear_single_block_kernel(%arg0: memref<8x128xf32, #tpu.memory_space<vmem>>, %arg1: memref<128x128xf32, #tpu.memory_space<vmem>>, %arg2: memref<1x128xf32, #tpu.memory_space<vmem>>, %arg3: memref<8x128xf32, #tpu.memory_space<vmem>>) attributes {dimension_semantics = [], scalar_prefetch = 0 : i64, scratch_operands = 0 : i64, tpu.core_type = #tpu.core_type<tc>} {
    %c0 = arith.constant 0 : index
    %c0_0 = arith.constant 0 : index
    %0 = vector.load %arg0[%c0, %c0_0] : memref<8x128xf32, #tpu.memory_space<vmem>>, vector<8x128xf32>
    %c0_1 = arith.constant 0 : index
    %c0_2 = arith.constant 0 : index
    %1 = vector.load %arg1[%c0_1, %c0_2] : memref<128x128xf32, #tpu.memory_space<vmem>>, vector<128x128xf32>
    %cst = arith.constant dense<0.000000e+00> : vector<8x128xf32>
    %2 = tpu.matmul %0, %1, %cst {dimension_numbers = #tpu.dot_dimension_numbers<[1], [0], [0], [1], [0, 0, 1, 1], [], []>} : vector<8x128xf32>, vector<128x128xf32>, vector<8x128xf32> -> vector<8x128xf32>
    %c0_3 = arith.constant 0 : index
    %c0_4 = arith.constant 0 : index
    %3 = vector.load %arg2[%c0_3, %c0_4] : memref<1x128xf32, #tpu.memory_space<vmem>>, vector<1x128xf32>
    %4 = vector.broadcast %3 : vector<1x128xf32> to vector<8x128xf32>
    %5 = arith.addf %2, %4 : vector<8x128xf32>
    %c0_5 = arith.constant 0 : index
    %c0_6 = arith.constant 0 : index
    %6 = vector.load %arg3[%c0_5, %c0_6] : memref<8x128xf32, #tpu.memory_space<vmem>>, vector<8x128xf32>
    tpu.vector_store %arg3[%c0_5, %c0_6], %5 {strides = array<i32>} : memref<8x128xf32, #tpu.memory_space<vmem>>, vector<8x128xf32>,
    return
  }
}

</mosaic_0001>

<llo_original>
// kernel: tpu_custom_call.1
$region0: #{tpu_custom_call.1}
  #allocation0 [shape = 'u32[]', space=smem, size = 0x4, offset = 0x4, fixed_abs, tag = 'smem constant byte address 0x4 - core index']
  #allocation1 [shape = 'u32[144,128]{1,0:T(1,128)}', space=vmem, size = 0x12000, scoped, tag = 'internal scratch']
  %s0 = inlined_call_operand.hbm [shape: f32[8,128], index: 0, kind: input, shape index: {}]
  %s1 = inlined_call_operand.hbm [shape: f32[128,128], index: 1, kind: input, shape index: {}]
  %s2 = inlined_call_operand.vmem [shape: f32[1,128], index: 2, kind: input, shape index: {}]
  %s3 = inlined_call_operand.hbm [shape: f32[8,128], index: 3, kind: output, shape index: {}]
  %s4 = sld [smem:[#allocation0]]
  $region30: #{tpu_custom_call.1} parent=0
    _
  %s6 = ssub.s32 1, %s4
  %s7 = scalar_select 0, %s6, %s4
  $region1: #{tpu_custom_call.1} parent=0
    #allocation2 [shape = 'u8[4096]{0}', space=vmem, size = 0x1000, scoped, tag = 'input window, operand 0, single buffered']
    #allocation3 [shape = 's32[1]{0}', space=sflag, size = 0x4, scoped, tag = 'scoped memory for tpu_custom_call.1']
    #allocation4 [shape = 's32[1]{0}', space=sflag, size = 0x4, scoped, tag = 'scoped memory for tpu_custom_call.1']
    #allocation5 [shape = 'u8[65536]{0}', space=vmem, size = 0x10000, scoped, tag = 'input window, operand 1, single buffered']
    #allocation6 [shape = 's32[1]{0}', space=sflag, size = 0x4, scoped, tag = 'scoped memory for tpu_custom_call.1']
    #allocation7 [shape = 'u8[4096]{0}', space=vmem, size = 0x1000, scoped, tag = 'output window, operand 0, single buffered']
    %8 = vsyncpa [#allocation3], 0
    %9 = vsyncpa [#allocation6], 0
    %10 = vsyncpa [#allocation4], 0
    // Predicated region
    $region2: #{tpu_custom_call.1} parent=1 // pred_check
      _
    $region3: #{tpu_custom_call.1} parent=1 // pred_check_branch
      %12 = sbr.rel (0) target = $region5
    $region4: #{tpu_custom_call.1} parent=1 // pred_region
      %s14 = ssub.s32 128, 128
      %15 = vsyncadd [#allocation3], %s14
      %s17 = sshll.u32 [#allocation2], 4
      %s18 = int_to_ptr.vmem [resolvable:$true] %s17
      %20 = dma.hbm_to_vmem [thread:$0]  %s0, 128, %s18, [#allocation3]
    $region5: #{tpu_custom_call.1} parent=1 // pred_fallthru
      _
    // Predicated region
    $region6: #{tpu_custom_call.1} parent=1 // pred_check
      _
    $region7: #{tpu_custom_call.1} parent=1 // pred_check_branch
      %22 = sbr.rel (0) target = $region9
    $region8: #{tpu_custom_call.1} parent=1 // pred_region
      %s24 = ssub.s32 2048, 2048
      %25 = vsyncadd [#allocation6], %s24
      %s26 = sshll.u32 [#allocation5], 4
      %s27 = int_to_ptr.vmem [resolvable:$true] %s26
      %32 = dma.hbm_to_vmem [thread:$0]  %s1, 2048, %s27, [#allocation6], 128, 128, 8
    $region9: #{tpu_custom_call.1} parent=1 // pred_fallthru
      _
    // Predicated region
    $region10: #{tpu_custom_call.1} parent=1 // pred_check
      _
    $region11: #{tpu_custom_call.1} parent=1 // pred_check_branch
      %34 = sbr.rel (0) target = $region13
    $region12: #{tpu_custom_call.1} parent=1 // pred_region
      _
    $region13: #{tpu_custom_call.1} parent=1 // pred_fallthru
      _
    // Predicated region
    $region14: #{tpu_custom_call.1} parent=1 // pred_check
      _
    $region15: #{tpu_custom_call.1} parent=1 // pred_check_branch
      %36 = sbr.rel (0) target = $region17
    $region16: #{tpu_custom_call.1} parent=1 // pred_region
      %37 = dma.done [#allocation3], 128
    $region17: #{tpu_custom_call.1} parent=1 // pred_fallthru
      _
    // Predicated region
    $region18: #{tpu_custom_call.1} parent=1 // pred_check
      _
    $region19: #{tpu_custom_call.1} parent=1 // pred_check_branch
      %39 = sbr.rel (0) target = $region21
    $region20: #{tpu_custom_call.1} parent=1 // pred_region
      %40 = dma.done [#allocation6], 2048
    $region21: #{tpu_custom_call.1} parent=1 // pred_fallthru
      _
    %v41 = vld [vmem:[#allocation2] sm:$0xff]
    %v42 = vld [vmem:[#allocation5] sm:$0xff]
    %v43 = vld [vmem:[#allocation5 + $0x8] sm:$0xff]
    %v44 = vld [vmem:[#allocation5 + $0x10] sm:$0xff]
    %v45 = vld [vmem:[#allocation5 + $0x18] sm:$0xff]
    %v46 = vld [vmem:[#allocation5 + $0x20] sm:$0xff]
    %v47 = vld [vmem:[#allocation5 + $0x28] sm:$0xff]
    %v48 = vld [vmem:[#allocation5 + $0x30] sm:$0xff]
    %v49 = vld [vmem:[#allocation5 + $0x38] sm:$0xff]
    %v50 = vld [vmem:[#allocation5 + $0x40] sm:$0xff]
    %v51 = vld [vmem:[#allocation5 + $0x48] sm:$0xff]
    %v52 = vld [vmem:[#allocation5 + $0x50] sm:$0xff]
    %v53 = vld [vmem:[#allocation5 + $0x58] sm:$0xff]
    %v54 = vld [vmem:[#allocation5 + $0x60] sm:$0xff]
    %v55 = vld [vmem:[#allocation5 + $0x68] sm:$0xff]
    %v56 = vld [vmem:[#allocation5 + $0x70] sm:$0xff]
    %v57 = vld [vmem:[#allocation5 + $0x78] sm:$0xff]
    %v58 = vld [vmem:[%s2] sm:$0x1]
    %v60 = vlaneseq
    %v61 = vshrl.u32 %v60, 7
    %v62 = vsub.s32 0, %v61
    %v63 = vrot.slane %v58, %v62
    %65 = vmatprep.subr.mxu0 0.0
    %66 = vmatpush1.msra.mxu0 %v42
    %67 = vmatprep.subr.mxu0 0.0
    %68 = vmatpush1.msra.mxu0 %v43
    %69 = vmatprep.subr.mxu0 0.0
    %70 = vmatpush1.msra.mxu0 %v44
    %71 = vmatprep.subr.mxu0 0.0
    %72 = vmatpush1.msra.mxu0 %v45
    %73 = vmatprep.subr.mxu0 0.0
    %74 = vmatpush1.msra.mxu0 %v46
    %75 = vmatprep.subr.mxu0 0.0
    %76 = vmatpush1.msra.mxu0 %v47
    %77 = vmatprep.subr.mxu0 0.0
    %78 = vmatpush1.msra.mxu0 %v48
    %79 = vmatprep.subr.mxu0 0.0
    %80 = vmatpush1.msra.mxu0 %v49
    %81 = vmatprep.subr.mxu0 0.0
    %82 = vmatpush1.msra.mxu0 %v50
    %83 = vmatprep.subr.mxu0 0.0
    %84 = vmatpush1.msra.mxu0 %v51
    %85 = vmatprep.subr.mxu0 0.0
    %86 = vmatpush1.msra.mxu0 %v52
    %87 = vmatprep.subr.mxu0 0.0
    %88 = vmatpush1.msra.mxu0 %v53
    %89 = vmatprep.subr.mxu0 0.0
    %90 = vmatpush1.msra.mxu0 %v54
    %91 = vmatprep.subr.mxu0 0.0
    %92 = vmatpush1.msra.mxu0 %v55
    %93 = vmatprep.subr.mxu0 0.0
    %94 = vmatpush1.msra.mxu0 %v56
    %95 = vmatprep.subr.mxu0 0.0
    %96 = vmatpush1.msra.mxu0 %v57
    %97 = vmatprep.subr.mxu0 0.0
    %98 = vmatpush1.msra.mxu0 0.0
    %99 = vmatprep.subr.mxu0 0.0
    %100 = vmatpush1.msra.mxu0 0.0
    %101 = vmatprep.subr.mxu0 0.0
    %102 = vmatpush1.msra.mxu0 0.0
    %103 = vmatprep.subr.mxu0 0.0
    %104 = vmatpush1.msra.mxu0 0.0
    %105 = vmatprep.subr.mxu0 0.0
    %106 = vmatpush1.msra.mxu0 0.0
    %107 = vmatprep.subr.mxu0 0.0
    %108 = vmatpush1.msra.mxu0 0.0
    %109 = vmatprep.subr.mxu0 0.0
    %110 = vmatpush1.msra.mxu0 0.0
    %111 = vmatprep.subr.mxu0 0.0
    %112 = vmatpush1.msra.mxu0 0.0
    %113 = vmatprep.subr.mxu0 0.0
    %114 = vmatpush1.msra.mxu0 0.0
    %115 = vmatprep.subr.mxu0 0.0
    %116 = vmatpush1.msra.mxu0 0.0
    %117 = vmatprep.subr.mxu0 0.0
    %118 = vmatpush1.msra.mxu0 0.0
    %119 = vmatprep.subr.mxu0 0.0
    %120 = vmatpush1.msra.mxu0 0.0
    %121 = vmatprep.subr.mxu0 0.0
    %122 = vmatpush1.msra.mxu0 0.0
    %123 = vmatprep.subr.mxu0 0.0
    %124 = vmatpush1.msra.mxu0 0.0
    %125 = vmatprep.subr.mxu0 0.0
    %126 = vmatpush1.msra.mxu0 0.0
    %127 = vmatprep.subr.mxu0 0.0
    %128 = vmatpush1.msra.mxu0 0.0
    %129 = vmatprep.mubr.f32.mxu0 0.0
    %130 = vmatmul.mubr.f32.gmra.mrb[0].mxu0 %v41
    %v131 = vpop.f32.mrb[0].mxu0
    %v132 = vadd.f32 %v63, %v131
    %v133 = vpop.f32.mrb[0].mxu0
    %134 = vdwg.mxu0
    %135 = vst [vmem:[#allocation7] sm:$0xff] %v132
    // Predicated region
    $region22: #{tpu_custom_call.1} parent=1 // pred_check
      _
    $region23: #{tpu_custom_call.1} parent=1 // pred_check_branch
      %137 = sbr.rel (0) target = $region25
    $region24: #{tpu_custom_call.1} parent=1 // pred_region
      %s139 = ssub.s32 128, 128
      %140 = vsyncadd [#allocation4], %s139
      %s142 = sshll.u32 [#allocation7], 4
      %s143 = int_to_ptr.vmem [resolvable:$true] %s142
      %145 = dma.vmem_to_hbm [thread:$0]  %s143, 128, %s3, [#allocation4]
    $region25: #{tpu_custom_call.1} parent=1 // pred_fallthru
      _
    // Predicated region
    $region26: #{tpu_custom_call.1} parent=1 // pred_check
      _
    $region27: #{tpu_custom_call.1} parent=1 // pred_check_branch
      %147 = sbr.rel (0) target = $region29
    $region28: #{tpu_custom_call.1} parent=1 // pred_region
      %148 = dma.done [#allocation4], 128
    $region29: #{tpu_custom_call.1} parent=1 // pred_fallthru
      _
    %149 = vsyncpa [#allocation3], 1
    %150 = vsyncpa [#allocation6], 1
    %151 = vsyncpa [#allocation4], 1

</llo_original>
